<compile_context>
chip_gen: v7x
topology: tpu7x:2x2x1
jax: 0.10.0
libtpu: 0.0.40
codegen_flags: <defaults>
</compile_context>

<pallas_src>
import jax
import jax.numpy as jnp
from jax.experimental import pallas as pl
from jax.experimental.pallas import tpu as pltpu


def _swiglu_expert_kernel(x_ref, w13_ref, w2_ref, o_ref, *scratch):
    """One grid step = one (token tile, ffn tile) pair.

    x_ref   : (Tt, H)        token tile (resident across the ffn axis)
    w13_ref : (H, 2*TF)      packed [W1^T tile | W3^T tile] (contiguous slab)
    w2_ref  : (TF, H)        W2^T tile
    o_ref   : (Tt, H)        output tile (resident across the ffn axis)
    scratch : () for f32 outputs (accumulate into o_ref), or (acc_f32,) otherwise
    """
    acc_ref = scratch[0] if scratch else o_ref
    f = pl.program_id(1)
    tf = w2_ref.shape[0]

    @pl.when(f == 0)
    def _():
        acc_ref[...] = jnp.zeros_like(acc_ref)

    x = x_ref[...]
    # Single fused MXU matmul for both gate and up projections of this ffn tile.
    r = jnp.dot(x, w13_ref[...], preferred_element_type=jnp.float32)   # (Tt, 2*TF)
    h1 = r[:, :tf]          # slice at a lane boundary (multiple of 128) -> free
    h3 = r[:, tf:]
    # SiLU(h1) * h3  (VPU + EUP); expert_dropout(p=0) is identity at eval.
    g = (h1 * jax.nn.sigmoid(h1)) * h3
    # Partial contribution of this ffn tile to the output (f32 accumulation).
    acc_ref[...] += jnp.dot(g.astype(w2_ref.dtype), w2_ref[...],
                            preferred_element_type=jnp.float32)

    if scratch:  # trace-time branch: only needed when output dtype != f32
        @pl.when(f == pl.num_programs(1) - 1)
        def _():
            o_ref[...] = acc_ref[...].astype(o_ref.dtype)


def prepare_expert_weights(w1, w2, w3, *, tile_ffn=512, dtype=jnp.bfloat16):
    """One-time weight preparation. Call at parameter-load time, NOT per forward.

    w1, w3: (F, H); w2: (H, F)  -- nn.Linear weight convention.
    Returns:
      w13: (F//tile_ffn, H, 2*tile_ffn); slab f = [W1^T tile f | W3^T tile f],
           contiguous per ffn tile (full-burst weight DMA).
      w2t: (F, H) = W2^T (already row-contiguous per ffn tile).
    """
    F, H = w1.shape
    assert w3.shape == (F, H) and w2.shape == (H, F)
    tile_ffn = min(tile_ffn, F)
    assert F % tile_ffn == 0, "tile_ffn must divide ffn_dim"
    n = F // tile_ffn
    w13 = jnp.concatenate(
        [w1.reshape(n, tile_ffn, H), w3.reshape(n, tile_ffn, H)], axis=1)  # (n, 2TF, H)
    w13 = jnp.transpose(w13, (0, 2, 1)).astype(dtype)                      # (n, H, 2TF)
    w2t = w2.T.astype(dtype)                                               # (F, H)
    return w13, w2t


def _vmem_capacity_bytes():
    """Physical VMEM capacity for the current TPU (conservative 64 MiB fallback)."""
    try:
        info = pltpu.get_tpu_info()
        cap = getattr(info, "vmem_capacity_bytes", None)
        if cap:
            return int(cap)
    except Exception:
        pass
    return 64 << 20   # v7x per-TC size; safe lower bound


def _divisors(n):
    ds = []
    i = 1
    while i * i <= n:
        if n % i == 0:
            ds.append(i)
            if i != n // i:
                ds.append(n // i)
        i += 1
    return sorted(ds)


def _choose_tile_t(T, H, tile_ffn, w_sz, x_sz, o_sz, use_scratch, vmem_budget):
    """Largest valid token tile that fits the VMEM budget.

    Per-step VMEM footprint:
      weights (double-buffered): 2 * (H*2TF + TF*H) * wsize = 6*H*TF*wsize
      x / out (double-buffered): 2 * Tt*H*(xsize + osize)
      f32 accumulator          : Tt*H*4              (only when output dtype != f32)
      f32 intermediates r, g   : Tt*2TF*4 + Tt*TF*(4 + wsize)
    """
    fixed = 6 * H * tile_ffn * w_sz
    per_tok = (H * 2 * (x_sz + o_sz)
               + (H * 4 if use_scratch else 0)
               + 2 * tile_ffn * 4
               + tile_ffn * (4 + w_sz))
    headroom = vmem_budget - fixed - (2 << 20)   # leave compiler scratch headroom
    max_by_vmem = max(8, headroom // per_tok) if headroom > 0 else 8

    cap = min(T, 1024, int(max_by_vmem))
    # Keep >= 2 programs on the parallel token axis when T allows it (v7x megacore).
    if T >= 32:
        cap = min(cap, T // 2)
    # tile_t must divide T, and be a multiple of 8 unless it covers all of T.
    candidates = [d for d in _divisors(T) if d == T or d % 8 == 0]
    ok = [d for d in candidates if d <= cap]
    return max(ok) if ok else min(candidates)


def phi_moe_expert_forward(x, w13, w2t, *, tile_t=None, vmem_fraction=0.75):
    """SwiGLU expert forward.

    x: (..., H); (w13, w2t) from prepare_expert_weights (w13 bakes in tile_ffn).
    Output dtype matches x.dtype; MXU runs in the prepared weight dtype (bf16),
    accumulation stays f32.
    """
    orig_shape = x.shape
    H = orig_shape[-1]
    x2 = x.reshape(-1, H)
    T = x2.shape[0]

    nf, H3, two_tf = w13.shape
    tile_ffn = two_tf // 2
    F, H2 = w2t.shape
    assert H2 == H and H3 == H and nf * tile_ffn == F

    out_dtype = x.dtype
    x2 = x2.astype(w13.dtype)               # bf16 MXU path; f32 accumulation in-kernel

    use_scratch = out_dtype != jnp.float32  # f32 output -> accumulate directly into o_ref
    w_sz = jnp.dtype(w13.dtype).itemsize
    x_sz = jnp.dtype(x2.dtype).itemsize
    o_sz = jnp.dtype(out_dtype).itemsize

    vmem_budget = int(vmem_fraction * _vmem_capacity_bytes())

    if tile_t is None:
        tile_t = _choose_tile_t(T, H, tile_ffn, w_sz, x_sz, o_sz, use_scratch,
                                vmem_budget)
    else:
        tile_t = min(tile_t, T)
    assert T % tile_t == 0, "tile_t must divide the (flattened) token count"
    assert tile_t == T or tile_t % 8 == 0

    scratch_shapes = [pltpu.VMEM((tile_t, H), jnp.float32)] if use_scratch else []

    # VMEM request: tile footprint (incl. f32 intermediates) with slack, capped at budget.
    vmem_need = (6 * H * tile_ffn * w_sz
                 + 2 * tile_t * H * (x_sz + o_sz)
                 + (tile_t * H * 4 if use_scratch else 0)
                 + tile_t * 2 * tile_ffn * 4
                 + tile_t * tile_ffn * (4 + w_sz))
    vmem_limit = int(min(vmem_budget, max(int(1.5 * vmem_need), 16 << 20)))

    nt = T // tile_t
    grid = (nt, nf)                          # reduction (ffn) axis last

    cost = pl.CostEstimate(
        flops=6 * T * F * H,                 # 2*T*H*2F (fused w13) + 2*T*F*H (w2)
        transcendentals=T * F,               # sigmoid inside SiLU
        bytes_accessed=(nt * 3 * F * H * w_sz        # weights re-streamed per token tile
                        + T * H * (x_sz + o_sz)),
    )

    out = pl.pallas_call(
        _swiglu_expert_kernel,
        out_shape=jax.ShapeDtypeStruct((T, H), out_dtype),
        grid_spec=pltpu.PrefetchScalarGridSpec(
            num_scalar_prefetch=0,
            grid=grid,
            in_specs=[
                pl.BlockSpec((tile_t, H), lambda t, f: (t, 0)),                 # x tile
                pl.BlockSpec((None, H, 2 * tile_ffn), lambda t, f: (f, 0, 0)),  # [W1^T|W3^T] slab
                pl.BlockSpec((tile_ffn, H), lambda t, f: (f, 0)),               # W2^T tile
            ],
            out_specs=pl.BlockSpec((tile_t, H), lambda t, f: (t, 0)),
            scratch_shapes=scratch_shapes,
        ),
        compiler_params=pltpu.CompilerParams(
            dimension_semantics=("parallel", "arbitrary"),
            vmem_limit_bytes=vmem_limit,
        ),
        cost_estimate=cost,
    )(x2, w13, w2t)

    return out.reshape(orig_shape)


if __name__ == "__main__":
    # Small TPU-friendly shapes consistent with the module:
    # tokens=8, hidden_size=128, intermediate_size=512.
    T, H, F = 8, 128, 512
    key = jax.random.PRNGKey(0)
    kx, k1, k2, k3 = jax.random.split(key, 4)

    x = jax.random.normal(kx, (T, H), dtype=jnp.float32)
    # deterministic nn.Linear-style init: U(-1/sqrt(fan_in), 1/sqrt(fan_in))
    b1 = 1.0 / jnp.sqrt(H)
    b2 = 1.0 / jnp.sqrt(F)
    w1 = jax.random.uniform(k1, (F, H), minval=-b1, maxval=b1, dtype=jnp.float32)
    w3 = jax.random.uniform(k3, (F, H), minval=-b1, maxval=b1, dtype=jnp.float32)
    w2 = jax.random.uniform(k2, (H, F), minval=-b2, maxval=b2, dtype=jnp.float32)

    # One-time weight prep (cached across forward calls in real use).
    # tile_ffn=256 here so the small test exercises the ffn-axis accumulation (2 steps).
    w13, w2t = prepare_expert_weights(w1, w2, w3, tile_ffn=256, dtype=jnp.bfloat16)

    out = phi_moe_expert_forward(x, w13, w2t)
    out = jax.block_until_ready(out)

    # Reference: f32 math on the same bf16-quantized parameters/activations.
    xr = x.astype(jnp.bfloat16).astype(jnp.float32)
    w1r = w1.astype(jnp.bfloat16).astype(jnp.float32)
    w3r = w3.astype(jnp.bfloat16).astype(jnp.float32)
    w2r = w2.astype(jnp.bfloat16).astype(jnp.float32)
    h1 = xr @ w1r.T
    h3 = xr @ w3r.T
    ref = ((h1 * jax.nn.sigmoid(h1)) * h3) @ w2r.T

    assert out.shape == (T, H)
    err = float(jnp.max(jnp.abs(out.astype(jnp.float32) - ref)))
    assert err < 2e-2, f"mismatch vs reference: max abs err {err}"
    print("KERNEL_OK")
</pallas_src>

<mosaic_0001>
module attributes {stable_mosaic.version = 11 : i64} {
  func.func @_swiglu_expert_kernel(%arg0: i32, %arg1: i32, %arg2: memref<8x128xbf16, #tpu.memory_space<vmem>>, %arg3: memref<1x128x512xbf16, #tpu.memory_space<vmem>>, %arg4: memref<256x128xbf16, #tpu.memory_space<vmem>>, %arg5: memref<8x128xf32, #tpu.memory_space<vmem>>) attributes {dimension_semantics = [#tpu.dimension_semantics<parallel>, #tpu.dimension_semantics<arbitrary>], iteration_bounds = array<i64: 1, 2>, scalar_prefetch = 0 : i64, scratch_operands = 0 : i64, tpu.core_type = #tpu.core_type<tc>, window_params = [{transform_indices = @transform_0, window_bounds = array<i64: 8, 128>}, {transform_indices = @transform_1, window_bounds = array<i64: 1, 128, 512>}, {transform_indices = @transform_2, window_bounds = array<i64: 256, 128>}, {transform_indices = @transform_3, window_bounds = array<i64: 8, 128>}]} {
    %c0_i32 = arith.constant 0 : i32
    %0 = arith.cmpi eq, %arg1, %c0_i32 : i32
    %1 = arith.extui %0 : i1 to i32
    %c0_i32_0 = arith.constant 0 : i32
    %2 = arith.cmpi ne, %1, %c0_i32_0 : i32
    scf.if %2 {
      %cst_13 = arith.constant 0.000000e+00 : f32
      %22 = vector.broadcast %cst_13 : f32 to vector<8x128xf32>
      %c0_14 = arith.constant 0 : index
      %c0_15 = arith.constant 0 : index
      %23 = vector.load %arg5[%c0_14, %c0_15] : memref<8x128xf32, #tpu.memory_space<vmem>>, vector<8x128xf32>
      tpu.vector_store %arg5[%c0_14, %c0_15], %22 {strides = array<i32>} : memref<8x128xf32, #tpu.memory_space<vmem>>, vector<8x128xf32>,
    } else {
    }
    %c0 = arith.constant 0 : index
    %c0_1 = arith.constant 0 : index
    %3 = vector.load %arg2[%c0, %c0_1] : memref<8x128xbf16, #tpu.memory_space<vmem>>, vector<8x128xbf16>
    %c0_2 = arith.constant 0 : index
    %c0_3 = arith.constant 0 : index
    %c0_4 = arith.constant 0 : index
    %4 = vector.load %arg3[%c0_2, %c0_3, %c0_4] : memref<1x128x512xbf16, #tpu.memory_space<vmem>>, vector<1x128x512xbf16>
    %5 = vector.shape_cast %4 : vector<1x128x512xbf16> to vector<128x512xbf16>
    %cst = arith.constant dense<0.000000e+00> : vector<8x512xf32>
    %6 = tpu.matmul %3, %5, %cst {dimension_numbers = #tpu.dot_dimension_numbers<[1], [0], [0], [1], [0, 0, 1, 1], [], []>} : vector<8x128xbf16>, vector<128x512xbf16>, vector<8x512xf32> -> vector<8x512xf32>
    %7 = vector.extract_strided_slice %6 {offsets = [0, 0], sizes = [8, 256], strides = [1, 1]} : vector<8x512xf32> to vector<8x256xf32>
    %8 = vector.extract_strided_slice %6 {offsets = [0, 256], sizes = [8, 256], strides = [1, 1]} : vector<8x512xf32> to vector<8x256xf32>
    %9 = arith.negf %7 : vector<8x256xf32>
    %10 = math.exp %9 : vector<8x256xf32>
    %cst_5 = arith.constant 1.000000e+00 : f32
    %11 = vector.broadcast %cst_5 : f32 to vector<8x256xf32>
    %12 = arith.addf %11, %10 : vector<8x256xf32>
    %13 = arith.divf %11, %12 : vector<8x256xf32>
    %14 = arith.mulf %7, %13 : vector<8x256xf32>
    %15 = arith.mulf %14, %8 : vector<8x256xf32>
    %c0_6 = arith.constant 0 : index
    %c0_7 = arith.constant 0 : index
    %16 = vector.load %arg5[%c0_6, %c0_7] : memref<8x128xf32, #tpu.memory_space<vmem>>, vector<8x128xf32>
    %17 = arith.truncf %15 : vector<8x256xf32> to vector<8x256xbf16>
    %c0_8 = arith.constant 0 : index
    %c0_9 = arith.constant 0 : index
    %18 = vector.load %arg4[%c0_8, %c0_9] : memref<256x128xbf16, #tpu.memory_space<vmem>>, vector<256x128xbf16>
    %cst_10 = arith.constant dense<0.000000e+00> : vector<8x128xf32>
    %19 = tpu.matmul %17, %18, %cst_10 {dimension_numbers = #tpu.dot_dimension_numbers<[1], [0], [0], [1], [0, 0, 1, 1], [], []>} : vector<8x256xbf16>, vector<256x128xbf16>, vector<8x128xf32> -> vector<8x128xf32>
    %20 = arith.addf %16, %19 : vector<8x128xf32>
    %c0_11 = arith.constant 0 : index
    %c0_12 = arith.constant 0 : index
    %21 = vector.load %arg5[%c0_11, %c0_12] : memref<8x128xf32, #tpu.memory_space<vmem>>, vector<8x128xf32>
    tpu.vector_store %arg5[%c0_11, %c0_12], %20 {strides = array<i32>} : memref<8x128xf32, #tpu.memory_space<vmem>>, vector<8x128xf32>,
    return
  }
  func.func @transform_0(%arg0: i32, %arg1: i32) -> (i32, i32) {
    %c0_i32 = arith.constant 0 : i32
    %c0_i32_0 = arith.constant 0 : i32
    return %arg0, %c0_i32 : i32, i32
  }
  func.func @transform_1(%arg0: i32, %arg1: i32) -> (i32, i32, i32) {
    %c0_i32 = arith.constant 0 : i32
    %c0_i32_0 = arith.constant 0 : i32
    %c0_i32_1 = arith.constant 0 : i32
    return %arg1, %c0_i32, %c0_i32_0 : i32, i32, i32
  }
  func.func @transform_2(%arg0: i32, %arg1: i32) -> (i32, i32) {
    %c0_i32 = arith.constant 0 : i32
    %c0_i32_0 = arith.constant 0 : i32
    return %arg1, %c0_i32 : i32, i32
  }
  func.func @transform_3(%arg0: i32, %arg1: i32) -> (i32, i32) {
    %c0_i32 = arith.constant 0 : i32
    %c0_i32_0 = arith.constant 0 : i32
    return %arg0, %c0_i32 : i32, i32
  }
}

</mosaic_0001>

<llo_original>
// kernel: tpu_custom_call.1
$region0: #{tpu_custom_call.1}
  #allocation0 [shape = 'u32[]', space=smem, size = 0x4, offset = 0x4, fixed_abs, tag = 'smem constant byte address 0x4 - core index']
  #allocation1 [shape = 'u32[144,128]{1,0:T(1,128)}', space=vmem, size = 0x12000, scoped, tag = 'internal scratch']
  %s0 = inlined_call_operand.hbm [shape: bf16[8,128], index: 0, kind: input, shape index: {}]
  %s1 = inlined_call_operand.hbm [shape: bf16[2,128,512], index: 1, kind: input, shape index: {}]
  %s2 = inlined_call_operand.hbm [shape: bf16[512,128], index: 2, kind: input, shape index: {}]
  %s3 = inlined_call_operand.hbm [shape: f32[8,128], index: 3, kind: output, shape index: {}]
  %s4 = sld [smem:[#allocation0]]
  $region61: #{tpu_custom_call.1} parent=0
    _
  %s6 = ssub.s32 1, %s4
  %s7 = scalar_select 0, %s6, %s4
  $region1: #{tpu_custom_call.1} parent=0
    #allocation2 [shape = 'u8[2048]{0}', space=vmem, size = 0x800, scoped, tag = 'input window, operand 0, single buffered']
    #allocation3 [shape = 's32[2]{0}', space=sflag, size = 0x8, scoped, tag = 'scoped memory for tpu_custom_call.1']
    #allocation4 [shape = 's32[2]{0}', space=sflag, size = 0x8, scoped, tag = 'scoped memory for tpu_custom_call.1']
    #allocation5 [shape = 'u8[262144]{0}', space=vmem, size = 0x40000, scoped, tag = 'input window, operand 1']
    #allocation6 [shape = 's32[2]{0}', space=sflag, size = 0x8, scoped, tag = 'scoped memory for tpu_custom_call.1']
    #allocation7 [shape = 'u8[131072]{0}', space=vmem, size = 0x20000, scoped, tag = 'input window, operand 2']
    #allocation8 [shape = 'u8[4096]{0}', space=vmem, size = 0x1000, scoped, tag = 'output window, operand 0, single buffered']
    %8 = vsyncpa [#allocation3], 0
    %9 = vsyncpa [#allocation6], 0
    %s10 = scalar_lea.sflag [#allocation6], 1
    %11 = vsyncpa %s10, 0
    %12 = vsyncpa [#allocation4], 0
    loop: start=0, step=1, limit=4
    $region2: #{tpu_custom_call.1} parent=1 // loop_pre_header
      _
    $region3: #{tpu_custom_call.1} parent=1 // loop_header
      %s14 = sphi 0, %s18
      %p15 = scmp.ge.s32.totalorder %s14, 4
      %s21 = sphi 0, %s33
      %s22 = sphi 0, %s29
      %s23 = sphi 0, %s21
      %s24 = sphi 0, %s22
      %s25 = sphi 0, %s23
      %s26 = sphi 0, %s24
      %s36 = sphi 0, %s38
      %s39 = sphi 0, %s36
      %s40 = sphi 0, %s39
      %s56 = sphi 0, %s40
      %s62 = sphi 0, %s64
      %s65 = sphi 0, %s62
      %s66 = sphi 0, %s65
      %s82 = sphi 0, %s66
      %s88 = sphi 0, %s90
      %s91 = sphi 0, %s88
      %s92 = sphi 0, %s91
      %s108 = sphi 0, %s92
      %s114 = sphi 0, %s116
      %s117 = sphi 0, %s114
      %s118 = sphi 0, %s117
      %s134 = sphi 0, %s118
    $region4: #{tpu_custom_call.1} parent=1 // loop_header_branch
      %17 = sbr.rel (%p15) target = $region8
    $region5: #{tpu_custom_call.1} parent=1 // loop_body
      %s19 = ssub.s32 %s14, 1
      %s20 = ssub.s32 %s14, 2
      %s27 = sadd.s32 1, %s22
      %p28 = scmp.ge.s32.totalorder %s27, 2
      %s29 = scalar_select %p28, 0, %s27
      %s30 = sadd.s32 1, %s21
      %s31 = scalar_select %p28, %s30, %s21
      %p32 = scmp.ge.s32.totalorder %s31, 1
      %s33 = scalar_select %p32, 0, %s31
      %s34 = ssub.s32 %s21, %s33
      %p35 = scmp.eq.s32.totalorder %s34, 0
      %s37 = sadd.s32 %s36, 1
      %s38 = scalar_select %p35, %s36, %s37
      %p41 = pneg %p35
      %p42 = scmp.eq.s32.totalorder %s14, 1
      %p43 = por %p41, %p42
      %p44 = scmp.ne.s32.totalorder %s36, %s39
      %p45 = scmp.eq.s32.totalorder %s14, 0
      %p46 = por %p44, %p45
      %p47 = scmp.ne.s32.totalorder %s36, %s39
      %p48 = scmp.eq.s32.totalorder %s19, 1
      %p49 = por %p47, %p48
      %p50 = scmp.ne.s32.totalorder %s39, %s40
      %p51 = scmp.eq.s32.totalorder %s19, 0
      %p52 = por %p50, %p51
      %p53 = scmp.ne.s32.totalorder %s39, %s40
      %p54 = scmp.eq.s32.totalorder %s20, 1
      %p55 = por %p53, %p54
      %p57 = scmp.ne.s32.totalorder %s40, %s56
      %p58 = scmp.eq.s32.totalorder %s20, 0
      %p59 = por %p57, %p58
      %s60 = ssub.s32 %s22, %s29
      %p61 = scmp.eq.s32.totalorder %s60, 0
      %s63 = sadd.s32 %s62, 1
      %s64 = scalar_select %p61, %s62, %s63
      %p67 = pneg %p61
      %p68 = scmp.eq.s32.totalorder %s14, 1
      %p69 = por %p67, %p68
      %p70 = scmp.ne.s32.totalorder %s62, %s65
      %p71 = scmp.eq.s32.totalorder %s14, 0
      %p72 = por %p70, %p71
      %p73 = scmp.ne.s32.totalorder %s62, %s65
      %p74 = scmp.eq.s32.totalorder %s19, 1
      %p75 = por %p73, %p74
      %p76 = scmp.ne.s32.totalorder %s65, %s66
      %p77 = scmp.eq.s32.totalorder %s19, 0
      %p78 = por %p76, %p77
      %p79 = scmp.ne.s32.totalorder %s65, %s66
      %p80 = scmp.eq.s32.totalorder %s20, 1
      %p81 = por %p79, %p80
      %p83 = scmp.ne.s32.totalorder %s66, %s82
      %p84 = scmp.eq.s32.totalorder %s20, 0
      %p85 = por %p83, %p84
      %s86 = ssub.s32 %s22, %s29
      %p87 = scmp.eq.s32.totalorder %s86, 0
      %s89 = sadd.s32 %s88, 1
      %s90 = scalar_select %p87, %s88, %s89
      %p93 = pneg %p87
      %p94 = scmp.eq.s32.totalorder %s14, 1
      %p95 = por %p93, %p94
      %p96 = scmp.ne.s32.totalorder %s88, %s91
      %p97 = scmp.eq.s32.totalorder %s14, 0
      %p98 = por %p96, %p97
      %p99 = scmp.ne.s32.totalorder %s88, %s91
      %p100 = scmp.eq.s32.totalorder %s19, 1
      %p101 = por %p99, %p100
      %p102 = scmp.ne.s32.totalorder %s91, %s92
      %p103 = scmp.eq.s32.totalorder %s19, 0
      %p104 = por %p102, %p103
      %p105 = scmp.ne.s32.totalorder %s91, %s92
      %p106 = scmp.eq.s32.totalorder %s20, 1
      %p107 = por %p105, %p106
      %p109 = scmp.ne.s32.totalorder %s92, %s108
      %p110 = scmp.eq.s32.totalorder %s20, 0
      %p111 = por %p109, %p110
      %s112 = ssub.s32 %s21, %s33
      %p113 = scmp.eq.s32.totalorder %s112, 0
      %s115 = sadd.s32 %s114, 1
      %s116 = scalar_select %p113, %s114, %s115
      %p119 = pneg %p113
      %p120 = scmp.eq.s32.totalorder %s14, 1
      %p121 = por %p119, %p120
      %p122 = scmp.ne.s32.totalorder %s114, %s117
      %p123 = scmp.eq.s32.totalorder %s14, 0
      %p124 = por %p122, %p123
      %p125 = scmp.ne.s32.totalorder %s114, %s117
      %p126 = scmp.eq.s32.totalorder %s19, 1
      %p127 = por %p125, %p126
      %p128 = scmp.ne.s32.totalorder %s117, %s118
      %p129 = scmp.eq.s32.totalorder %s19, 0
      %p130 = por %p128, %p129
      %p131 = scmp.ne.s32.totalorder %s117, %s118
      %p132 = scmp.eq.s32.totalorder %s20, 1
      %p133 = por %p131, %p132
      %p135 = scmp.ne.s32.totalorder %s118, %s134
      %p136 = scmp.eq.s32.totalorder %s20, 0
      %p137 = por %p135, %p136
      %p138 = scmp.le.s32.totalorder 1, %s14
      %p139 = scmp.lt.s32.totalorder %s14, 3
      %p140 = pnand %p138, %p139
      %p141 = pneg %p140
      // Predicated region
      $region9: #{tpu_custom_call.1} parent=5 // pred_check
        _
      $region10: #{tpu_custom_call.1} parent=5 // pred_check_branch
        %143 = sbr.rel (%p140) target = $region12
      $region11: #{tpu_custom_call.1} parent=5 // pred_region
        %s144 = ssub.s32 %s14, 1
        // Predicated region
        $region13: #{tpu_custom_call.1} parent=11 // pred_check
          %p145 = pneg %p52
        $region14: #{tpu_custom_call.1} parent=11 // pred_check_branch
          %147 = sbr.rel (%p145) target = $region16
        $region15: #{tpu_custom_call.1} parent=11 // pred_region
          %s149 = ssub.s32 64, 64
          %150 = vsyncadd [#allocation3], %s149
          %s151 = smul.addr %s23, 64
          %s152 = scalar_lea.hbm %s0, %s151
          %s154 = sshll.u32 [#allocation2], 4
          %s155 = int_to_ptr.vmem [resolvable:$true] %s154
          %157 = dma.hbm_to_vmem [thread:$0]  %s152, 64, %s155, [#allocation3]
        $region16: #{tpu_custom_call.1} parent=11 // pred_fallthru
          _
      $region12: #{tpu_custom_call.1} parent=5 // pred_fallthru
        _
      %p158 = scmp.lt.s32.totalorder %s14, 2
      // Predicated region
      $region17: #{tpu_custom_call.1} parent=5 // pred_check
        %p159 = pneg %p158
      $region18: #{tpu_custom_call.1} parent=5 // pred_check_branch
        %161 = sbr.rel (%p159) target = $region20
      $region19: #{tpu_custom_call.1} parent=5 // pred_region
        // Predicated region
        $region21: #{tpu_custom_call.1} parent=19 // pred_check
          %p162 = pneg %p72
        $region22: #{tpu_custom_call.1} parent=19 // pred_check_branch
          %164 = sbr.rel (%p162) target = $region24
        $region23: #{tpu_custom_call.1} parent=19 // pred_region
          %s165 = sand.u32 %s14, 1
          %s166 = scalar_lea.sflag [#allocation6], %s165
          %s167 = sand.u32 %s62, 1
          %s168 = smul.addr %s167, 256
          %s169 = scalar_lea.vmem [#allocation5], %s168
          %s171 = ssub.s32 4096, 4096
          %172 = vsyncadd %s166, %s171
          %s173 = smul.addr %s22, 64
          %s174 = smul.addr %s173, 64
          %s175 = scalar_lea.hbm %s1, %s174
          %s176 = sshll.u32 %s169, 4
          %s177 = int_to_ptr.vmem [resolvable:$true] %s176
          %182 = dma.hbm_to_vmem [thread:$0]  %s175, 4096, %s177, %s166, 256, 256, 16
        $region24: #{tpu_custom_call.1} parent=19 // pred_fallthru
          _
        // Predicated region
        $region25: #{tpu_custom_call.1} parent=19 // pred_check
          %p183 = pneg %p98
        $region26: #{tpu_custom_call.1} parent=19 // pred_check_branch
          %185 = sbr.rel (%p183) target = $region28
        $region27: #{tpu_custom_call.1} parent=19 // pred_region
          %s186 = sand.u32 %s14, 1
          %s187 = scalar_lea.sflag [#allocation6], %s186
          %s188 = sand.u32 %s88, 1
          %s189 = smul.addr %s188, 128
          %s190 = scalar_lea.vmem [#allocation7], %s189
          %s191 = smul.u32 32, %s22
          %s193 = ssub.s32 2048, 2048
          %194 = vsyncadd %s187, %s193
          %s195 = smul.addr %s191, 64
          %s196 = scalar_lea.hbm %s2, %s195
          %s197 = sshll.u32 %s190, 4
          %s198 = int_to_ptr.vmem [resolvable:$true] %s197
          %203 = dma.hbm_to_vmem [thread:$0]  %s196, 2048, %s198, %s187, 64, 64, 4
        $region28: #{tpu_custom_call.1} parent=19 // pred_fallthru
          _
      $region20: #{tpu_custom_call.1} parent=5 // pred_fallthru
        _
      %p204 = scmp.le.s32.totalorder 1, %s14
      %p205 = scmp.lt.s32.totalorder %s14, 3
      %p206 = pnand %p204, %p205
      %p207 = pneg %p206
      // Predicated region
      $region29: #{tpu_custom_call.1} parent=5 // pred_check
        _
      $region30: #{tpu_custom_call.1} parent=5 // pred_check_branch
        %209 = sbr.rel (%p206) target = $region32
      $region31: #{tpu_custom_call.1} parent=5 // pred_region
        %s210 = ssub.s32 %s14, 1
        // Predicated region
        $region33: #{tpu_custom_call.1} parent=31 // pred_check
          %p211 = pneg %p52
        $region34: #{tpu_custom_call.1} parent=31 // pred_check_branch
          %213 = sbr.rel (%p211) target = $region36
        $region35: #{tpu_custom_call.1} parent=31 // pred_region
          %214 = dma.done [#allocation3], 64
        $region36: #{tpu_custom_call.1} parent=31 // pred_fallthru
          _
        %s215 = sand.u32 %s19, 1
        %s216 = scalar_lea.sflag [#allocation6], %s215
        %s217 = sand.u32 %s65, 1
        %s218 = smul.addr %s217, 256
        %s219 = scalar_lea.vmem [#allocation5], %s218
        // Predicated region
        $region37: #{tpu_custom_call.1} parent=31 // pred_check
          %p220 = pneg %p78
        $region38: #{tpu_custom_call.1} parent=31 // pred_check_branch
          %222 = sbr.rel (%p220) target = $region40
        $region39: #{tpu_custom_call.1} parent=31 // pred_region
          %223 = dma.done %s216, 4096
        $region40: #{tpu_custom_call.1} parent=31 // pred_fallthru
          _
        %s224 = sand.u32 %s19, 1
        %s225 = scalar_lea.sflag [#allocation6], %s224
        %s226 = sand.u32 %s91, 1
        %s227 = smul.addr %s226, 128
        %s228 = scalar_lea.vmem [#allocation7], %s227
        // Predicated region
        $region41: #{tpu_custom_call.1} parent=31 // pred_check
          %p229 = pneg %p104
        $region42: #{tpu_custom_call.1} parent=31 // pred_check_branch
          %231 = sbr.rel (%p229) target = $region44
        $region43: #{tpu_custom_call.1} parent=31 // pred_region
          %232 = dma.done %s225, 2048
        $region44: #{tpu_custom_call.1} parent=31 // pred_fallthru
          _
        %p233 = pneg %p52
        %p234 = pneg %p49
        %s235 = sand.u32 %s19, 1
        %s236 = scalar_lea.sflag [#allocation6], %s235
        %s237 = sand.u32 %s65, 1
        %s238 = smul.addr %s237, 256
        %s239 = scalar_lea.vmem [#allocation5], %s238
        %p240 = pneg %p78
        %p241 = pneg %p75
        %s242 = sand.u32 %s19, 1
        %s243 = scalar_lea.sflag [#allocation6], %s242
        %s244 = sand.u32 %s91, 1
        %s245 = smul.addr %s244, 128
        %s246 = scalar_lea.vmem [#allocation7], %s245
        %p247 = pneg %p104
        %p248 = pneg %p101
        %p249 = pneg %p130
        %p250 = pneg %p127
        %s251 = smul.u32 32, %s24
        %p253 = scmp.eq.s32.totalorder %s24, 0
        // Predicated region
        $region45: #{tpu_custom_call.1} parent=31 // pred_check
          %p254 = pneg %p253
        $region46: #{tpu_custom_call.1} parent=31 // pred_check_branch
          %256 = sbr.rel (%p254) target = $region48
        $region47: #{tpu_custom_call.1} parent=31 // pred_region
          %257 = vst [vmem:[#allocation8] sm:$0xff] 0.0
        $region48: #{tpu_custom_call.1} parent=31 // pred_fallthru
          _
        %v258 = vld [vmem:[#allocation2] sm:$0xf]
        %v259 = vld [vmem:[%s219] sm:$0xff]
        %v260 = vld [vmem:[%s219 + $0x8] sm:$0xff]
        %v261 = vld [vmem:[%s219 + $0x10] sm:$0xff]
        %v262 = vld [vmem:[%s219 + $0x18] sm:$0xff]
        %v263 = vld [vmem:[%s219 + $0x20] sm:$0xff]
        %v264 = vld [vmem:[%s219 + $0x28] sm:$0xff]
        %v265 = vld [vmem:[%s219 + $0x30] sm:$0xff]
        %v266 = vld [vmem:[%s219 + $0x38] sm:$0xff]
        %v267 = vld [vmem:[%s219 + $0x40] sm:$0xff]
        %v268 = vld [vmem:[%s219 + $0x48] sm:$0xff]
        %v269 = vld [vmem:[%s219 + $0x50] sm:$0xff]
        %v270 = vld [vmem:[%s219 + $0x58] sm:$0xff]
        %v271 = vld [vmem:[%s219 + $0x60] sm:$0xff]
        %v272 = vld [vmem:[%s219 + $0x68] sm:$0xff]
        %v273 = vld [vmem:[%s219 + $0x70] sm:$0xff]
        %v274 = vld [vmem:[%s219 + $0x78] sm:$0xff]
        %v275 = vld [vmem:[%s219 + $0x80] sm:$0xff]
        %v276 = vld [vmem:[%s219 + $0x88] sm:$0xff]
        %v277 = vld [vmem:[%s219 + $0x90] sm:$0xff]
        %v278 = vld [vmem:[%s219 + $0x98] sm:$0xff]
        %v279 = vld [vmem:[%s219 + $0xa0] sm:$0xff]
        %v280 = vld [vmem:[%s219 + $0xa8] sm:$0xff]
        %v281 = vld [vmem:[%s219 + $0xb0] sm:$0xff]
        %v282 = vld [vmem:[%s219 + $0xb8] sm:$0xff]
        %v283 = vld [vmem:[%s219 + $0xc0] sm:$0xff]
        %v284 = vld [vmem:[%s219 + $0xc8] sm:$0xff]
        %v285 = vld [vmem:[%s219 + $0xd0] sm:$0xff]
        %v286 = vld [vmem:[%s219 + $0xd8] sm:$0xff]
        %v287 = vld [vmem:[%s219 + $0xe0] sm:$0xff]
        %v288 = vld [vmem:[%s219 + $0xe8] sm:$0xff]
        %v289 = vld [vmem:[%s219 + $0xf0] sm:$0xff]
        %v290 = vld [vmem:[%s219 + $0xf8] sm:$0xff]
        %v323 = vunpack.c.l.b16 %v259
        %v324 = vunpack.c.h.b16 %v259
        %v325 = vunpack.c.l.b16 %v260
        %v326 = vunpack.c.h.b16 %v260
        %v327 = vunpack.c.l.b16 %v261
        %v328 = vunpack.c.h.b16 %v261
        %v329 = vunpack.c.l.b16 %v262
        %v330 = vunpack.c.h.b16 %v262
        %v331 = vunpack.c.l.b16 %v263
        %v332 = vunpack.c.h.b16 %v263
        %v333 = vunpack.c.l.b16 %v264
        %v334 = vunpack.c.h.b16 %v264
        %v335 = vunpack.c.l.b16 %v265
        %v336 = vunpack.c.h.b16 %v265
        %v337 = vunpack.c.l.b16 %v266
        %v338 = vunpack.c.h.b16 %v266
        %v339 = vunpack.c.l.b16 %v267
        %v340 = vunpack.c.h.b16 %v267
        %v341 = vunpack.c.l.b16 %v268
        %v342 = vunpack.c.h.b16 %v268
        %v343 = vunpack.c.l.b16 %v269
        %v344 = vunpack.c.h.b16 %v269
        %v345 = vunpack.c.l.b16 %v270
        %v346 = vunpack.c.h.b16 %v270
        %v347 = vunpack.c.l.b16 %v271
        %v348 = vunpack.c.h.b16 %v271
        %v349 = vunpack.c.l.b16 %v272
        %v350 = vunpack.c.h.b16 %v272
        %v351 = vunpack.c.l.b16 %v273
        %v352 = vunpack.c.h.b16 %v273
        %v353 = vunpack.c.l.b16 %v274
        %v354 = vunpack.c.h.b16 %v274
        %v355 = vunpack.c.l.b16 %v275
        %v356 = vunpack.c.h.b16 %v275
        %v357 = vunpack.c.l.b16 %v276
        %v358 = vunpack.c.h.b16 %v276
        %v359 = vunpack.c.l.b16 %v277
        %v360 = vunpack.c.h.b16 %v277
        %v361 = vunpack.c.l.b16 %v278
        %v362 = vunpack.c.h.b16 %v278
        %v363 = vunpack.c.l.b16 %v279
        %v364 = vunpack.c.h.b16 %v279
        %v365 = vunpack.c.l.b16 %v280
        %v366 = vunpack.c.h.b16 %v280
        %v367 = vunpack.c.l.b16 %v281
        %v368 = vunpack.c.h.b16 %v281
        %v369 = vunpack.c.l.b16 %v282
        %v370 = vunpack.c.h.b16 %v282
        %v371 = vunpack.c.l.b16 %v283
        %v372 = vunpack.c.h.b16 %v283
        %v373 = vunpack.c.l.b16 %v284
        %v374 = vunpack.c.h.b16 %v284
        %v375 = vunpack.c.l.b16 %v285
        %v376 = vunpack.c.h.b16 %v285
        %v377 = vunpack.c.l.b16 %v286
        %v378 = vunpack.c.h.b16 %v286
        %v379 = vunpack.c.l.b16 %v287
        %v380 = vunpack.c.h.b16 %v287
        %v381 = vunpack.c.l.b16 %v288
        %v382 = vunpack.c.h.b16 %v288
        %v383 = vunpack.c.l.b16 %v289
        %v384 = vunpack.c.h.b16 %v289
        %v385 = vunpack.c.l.b16 %v290
        %v386 = vunpack.c.h.b16 %v290
        %v387 = vpack.c.b16 %v327, %v323
        %v388 = vpack.c.b16 %v328, %v324
        %v389 = vpack.c.b16 %v329, %v325
        %v390 = vpack.c.b16 %v330, %v326
        %v391 = vpack.c.b16 %v335, %v331
        %v392 = vpack.c.b16 %v336, %v332
        %v393 = vpack.c.b16 %v337, %v333
        %v394 = vpack.c.b16 %v338, %v334
        %v395 = vpack.c.b16 %v343, %v339
        %v396 = vpack.c.b16 %v344, %v340
        %v397 = vpack.c.b16 %v345, %v341
        %v398 = vpack.c.b16 %v346, %v342
        %v399 = vpack.c.b16 %v351, %v347
        %v400 = vpack.c.b16 %v352, %v348
        %v401 = vpack.c.b16 %v353, %v349
        %v402 = vpack.c.b16 %v354, %v350
        %v403 = vpack.c.b16 %v359, %v355
        %v404 = vpack.c.b16 %v360, %v356
        %v405 = vpack.c.b16 %v361, %v357
        %v406 = vpack.c.b16 %v362, %v358
        %v407 = vpack.c.b16 %v367, %v363
        %v408 = vpack.c.b16 %v368, %v364
        %v409 = vpack.c.b16 %v369, %v365
        %v410 = vpack.c.b16 %v370, %v366
        %v411 = vpack.c.b16 %v375, %v371
        %v412 = vpack.c.b16 %v376, %v372
        %v413 = vpack.c.b16 %v377, %v373
        %v414 = vpack.c.b16 %v378, %v374
        %v415 = vpack.c.b16 %v383, %v379
        %v416 = vpack.c.b16 %v384, %v380
        %v417 = vpack.c.b16 %v385, %v381
        %v418 = vpack.c.b16 %v386, %v382
        %451 = vmatprep.subr.bf16.mxu0 %v388
        %452 = vmatpush1.bf16.msra.mxu0 %v387
        %453 = vmatprep.subr.bf16.mxu0 %v392
        %454 = vmatpush1.bf16.msra.mxu0 %v391
        %455 = vmatprep.subr.bf16.mxu0 %v396
        %456 = vmatpush1.bf16.msra.mxu0 %v395
        %457 = vmatprep.subr.bf16.mxu0 %v400
        %458 = vmatpush1.bf16.msra.mxu0 %v399
        %459 = vmatprep.subr.bf16.mxu0 %v404
        %460 = vmatpush1.bf16.msra.mxu0 %v403
        %461 = vmatprep.subr.bf16.mxu0 %v408
        %462 = vmatpush1.bf16.msra.mxu0 %v407
        %463 = vmatprep.subr.bf16.mxu0 %v412
        %464 = vmatpush1.bf16.msra.mxu0 %v411
        %465 = vmatprep.subr.bf16.mxu0 %v416
        %466 = vmatpush1.bf16.msra.mxu0 %v415
        %467 = vmatprep.subr.bf16.mxu0 0
        %468 = vmatpush1.bf16.msra.mxu0 0
        %469 = vmatprep.subr.bf16.mxu0 0
        %470 = vmatpush1.bf16.msra.mxu0 0
        %471 = vmatprep.subr.bf16.mxu0 0
        %472 = vmatpush1.bf16.msra.mxu0 0
        %473 = vmatprep.subr.bf16.mxu0 0
        %474 = vmatpush1.bf16.msra.mxu0 0
        %475 = vmatprep.subr.bf16.mxu0 0
        %476 = vmatpush1.bf16.msra.mxu0 0
        %477 = vmatprep.subr.bf16.mxu0 0
        %478 = vmatpush1.bf16.msra.mxu0 0
        %479 = vmatprep.subr.bf16.mxu0 0
        %480 = vmatpush1.bf16.msra.mxu0 0
        %481 = vmatprep.subr.bf16.mxu0 0
        %482 = vmatpush1.bf16.msra.mxu0 0
        %483 = vmatprep.mubr.bf16.mxu0 0
        %484 = vmatmul.mubr.bf16.gmra.mrb[0].mxu0 %v258
        %v485 = vpop.f32.mrb[0].mxu0
        %v486 = vadd.f32 0.0, %v485
        %v487 = vpop.f32.mrb[0].mxu0
        %v488 = vadd.f32 0.0, %v487
        %v489 = vpop.f32.mrb[0].mxu0
        %v490 = vpop.f32.mrb[0].mxu0
        %491 = vdwg.mxu0
        %492 = vmatprep.subr.bf16.mxu0 %v390
        %493 = vmatpush1.bf16.msra.mxu0 %v389
        %494 = vmatprep.subr.bf16.mxu0 %v394
        %495 = vmatpush1.bf16.msra.mxu0 %v393
        %496 = vmatprep.subr.bf16.mxu0 %v398
        %497 = vmatpush1.bf16.msra.mxu0 %v397
        %498 = vmatprep.subr.bf16.mxu0 %v402
        %499 = vmatpush1.bf16.msra.mxu0 %v401
        %500 = vmatprep.subr.bf16.mxu0 %v406
        %501 = vmatpush1.bf16.msra.mxu0 %v405
        %502 = vmatprep.subr.bf16.mxu0 %v410
        %503 = vmatpush1.bf16.msra.mxu0 %v409
        %504 = vmatprep.subr.bf16.mxu0 %v414
        %505 = vmatpush1.bf16.msra.mxu0 %v413
        %506 = vmatprep.subr.bf16.mxu0 %v418
        %507 = vmatpush1.bf16.msra.mxu0 %v417
        %508 = vmatprep.subr.bf16.mxu0 0
        %509 = vmatpush1.bf16.msra.mxu0 0
        %510 = vmatprep.subr.bf16.mxu0 0
        %511 = vmatpush1.bf16.msra.mxu0 0
        %512 = vmatprep.subr.bf16.mxu0 0
        %513 = vmatpush1.bf16.msra.mxu0 0
        %514 = vmatprep.subr.bf16.mxu0 0
        %515 = vmatpush1.bf16.msra.mxu0 0
        %516 = vmatprep.subr.bf16.mxu0 0
        %517 = vmatpush1.bf16.msra.mxu0 0
        %518 = vmatprep.subr.bf16.mxu0 0
        %519 = vmatpush1.bf16.msra.mxu0 0
        %520 = vmatprep.subr.bf16.mxu0 0
        %521 = vmatpush1.bf16.msra.mxu0 0
        %522 = vmatprep.subr.bf16.mxu0 0
        %523 = vmatpush1.bf16.msra.mxu0 0
        %524 = vmatprep.mubr.bf16.mxu0 0
        %525 = vmatmul.mubr.bf16.gmra.mrb[0].mxu0 %v258
        %v526 = vpop.f32.mrb[0].mxu0
        %v527 = vadd.f32 0.0, %v526
        %v528 = vpop.f32.mrb[0].mxu0
        %v529 = vadd.f32 0.0, %v528
        %v530 = vpop.f32.mrb[0].mxu0
        %v531 = vpop.f32.mrb[0].mxu0
        %532 = vdwg.mxu0
        %v533 = vxor.u32 %v486, 2147483648
        %v534 = vxor.u32 %v488, 2147483648
        %v535 = vmul.f32 %v533, 1.442695
        %v536 = vpow.pop %v535
        %v537 = vmul.f32 %v534, 1.442695
        %v538 = vpow.pop %v537
        %v539 = vadd.f32 %v536, 1.0
        %v540 = vadd.f32 %v538, 1.0
        %v541 = vrcp.pop %v539
        %v542 = vmul.f32 1.0, %v541
        %v543 = vrcp.pop %v540
        %v544 = vmul.f32 1.0, %v543
        %v545 = vmul.f32 %v486, %v542
        %v546 = vmul.f32 %v488, %v544
        %v547 = vmul.f32 %v545, %v527
        %v548 = vmul.f32 %v546, %v529
        %v549 = vld [vmem:[#allocation8] sm:$0xff]
        %v550 = vpack.c.bf16 %v547, %v547
        %v551 = vpack.c.bf16 %v548, %v548
        %v552 = vld [vmem:[%s228] sm:$0xf]
        %v553 = vld [vmem:[%s228 + $0x4] sm:$0xf]
        %v554 = vld [vmem:[%s228 + $0x8] sm:$0xf]
        %v555 = vld [vmem:[%s228 + $0xc] sm:$0xf]
        %v556 = vld [vmem:[%s228 + $0x10] sm:$0xf]
        %v557 = vld [vmem:[%s228 + $0x14] sm:$0xf]
        %v558 = vld [vmem:[%s228 + $0x18] sm:$0xf]
        %v559 = vld [vmem:[%s228 + $0x1c] sm:$0xf]
        %v560 = vld [vmem:[%s228 + $0x20] sm:$0xf]
        %v561 = vld [vmem:[%s228 + $0x24] sm:$0xf]
        %v562 = vld [vmem:[%s228 + $0x28] sm:$0xf]
        %v563 = vld [vmem:[%s228 + $0x2c] sm:$0xf]
        %v564 = vld [vmem:[%s228 + $0x30] sm:$0xf]
        %v565 = vld [vmem:[%s228 + $0x34] sm:$0xf]
        %v566 = vld [vmem:[%s228 + $0x38] sm:$0xf]
        %v567 = vld [vmem:[%s228 + $0x3c] sm:$0xf]
        %v568 = vld [vmem:[%s228 + $0x40] sm:$0xf]
        %v569 = vld [vmem:[%s228 + $0x44] sm:$0xf]
        %v570 = vld [vmem:[%s228 + $0x48] sm:$0xf]
        %v571 = vld [vmem:[%s228 + $0x4c] sm:$0xf]
        %v572 = vld [vmem:[%s228 + $0x50] sm:$0xf]
        %v573 = vld [vmem:[%s228 + $0x54] sm:$0xf]
        %v574 = vld [vmem:[%s228 + $0x58] sm:$0xf]
        %v575 = vld [vmem:[%s228 + $0x5c] sm:$0xf]
        %v576 = vld [vmem:[%s228 + $0x60] sm:$0xf]
        %v577 = vld [vmem:[%s228 + $0x64] sm:$0xf]
        %v578 = vld [vmem:[%s228 + $0x68] sm:$0xf]
        %v579 = vld [vmem:[%s228 + $0x6c] sm:$0xf]
        %v580 = vld [vmem:[%s228 + $0x70] sm:$0xf]
        %v581 = vld [vmem:[%s228 + $0x74] sm:$0xf]
        %v582 = vld [vmem:[%s228 + $0x78] sm:$0xf]
        %v583 = vld [vmem:[%s228 + $0x7c] sm:$0xf]
        %v616 = vunpack.c.l.b16 %v552
        %v617 = vunpack.c.l.b16 %v553
        %v618 = vunpack.c.l.b16 %v554
        %v619 = vunpack.c.l.b16 %v555
        %v620 = vunpack.c.l.b16 %v556
        %v621 = vunpack.c.l.b16 %v557
        %v622 = vunpack.c.l.b16 %v558
        %v623 = vunpack.c.l.b16 %v559
        %v624 = vunpack.c.l.b16 %v560
        %v625 = vunpack.c.l.b16 %v561
        %v626 = vunpack.c.l.b16 %v562
        %v627 = vunpack.c.l.b16 %v563
        %v628 = vunpack.c.l.b16 %v564
        %v629 = vunpack.c.l.b16 %v565
        %v630 = vunpack.c.l.b16 %v566
        %v631 = vunpack.c.l.b16 %v567
        %v632 = vunpack.c.l.b16 %v568
        %v633 = vunpack.c.l.b16 %v569
        %v634 = vunpack.c.l.b16 %v570
        %v635 = vunpack.c.l.b16 %v571
        %v636 = vunpack.c.l.b16 %v572
        %v637 = vunpack.c.l.b16 %v573
        %v638 = vunpack.c.l.b16 %v574
        %v639 = vunpack.c.l.b16 %v575
        %v640 = vunpack.c.l.b16 %v576
        %v641 = vunpack.c.l.b16 %v577
        %v642 = vunpack.c.l.b16 %v578
        %v643 = vunpack.c.l.b16 %v579
        %v644 = vunpack.c.l.b16 %v580
        %v645 = vunpack.c.l.b16 %v581
        %v646 = vunpack.c.l.b16 %v582
        %v647 = vunpack.c.l.b16 %v583
        %v648 = vpack.c.b16 %v617, %v616
        %v649 = vpack.c.b16 %v619, %v618
        %v650 = vpack.c.b16 %v621, %v620
        %v651 = vpack.c.b16 %v623, %v622
        %v652 = vpack.c.b16 %v625, %v624
        %v653 = vpack.c.b16 %v627, %v626
        %v654 = vpack.c.b16 %v629, %v628
        %v655 = vpack.c.b16 %v631, %v630
        %v656 = vpack.c.b16 %v633, %v632
        %v657 = vpack.c.b16 %v635, %v634
        %v658 = vpack.c.b16 %v637, %v636
        %v659 = vpack.c.b16 %v639, %v638
        %v660 = vpack.c.b16 %v641, %v640
        %v661 = vpack.c.b16 %v643, %v642
        %v662 = vpack.c.b16 %v645, %v644
        %v663 = vpack.c.b16 %v647, %v646
        %680 = vmatprep.subr.bf16.mxu0 0
        %681 = vmatpush1.bf16.msra.mxu0 %v648
        %682 = vmatprep.subr.bf16.mxu0 0
        %683 = vmatpush1.bf16.msra.mxu0 %v649
        %684 = vmatprep.subr.bf16.mxu0 0
        %685 = vmatpush1.bf16.msra.mxu0 %v650
        %686 = vmatprep.subr.bf16.mxu0 0
        %687 = vmatpush1.bf16.msra.mxu0 %v651
        %688 = vmatprep.subr.bf16.mxu0 0
        %689 = vmatpush1.bf16.msra.mxu0 %v652
        %690 = vmatprep.subr.bf16.mxu0 0
        %691 = vmatpush1.bf16.msra.mxu0 %v653
        %692 = vmatprep.subr.bf16.mxu0 0
        %693 = vmatpush1.bf16.msra.mxu0 %v654
        %694 = vmatprep.subr.bf16.mxu0 0
        %695 = vmatpush1.bf16.msra.mxu0 %v655
        %696 = vmatprep.subr.bf16.mxu0 0
        %697 = vmatpush1.bf16.msra.mxu0 %v656
        %698 = vmatprep.subr.bf16.mxu0 0
        %699 = vmatpush1.bf16.msra.mxu0 %v657
        %700 = vmatprep.subr.bf16.mxu0 0
        %701 = vmatpush1.bf16.msra.mxu0 %v658
        %702 = vmatprep.subr.bf16.mxu0 0
        %703 = vmatpush1.bf16.msra.mxu0 %v659
        %704 = vmatprep.subr.bf16.mxu0 0
        %705 = vmatpush1.bf16.msra.mxu0 %v660
        %706 = vmatprep.subr.bf16.mxu0 0
        %707 = vmatpush1.bf16.msra.mxu0 %v661
        %708 = vmatprep.subr.bf16.mxu0 0
        %709 = vmatpush1.bf16.msra.mxu0 %v662
        %710 = vmatprep.subr.bf16.mxu0 0
        %711 = vmatpush1.bf16.msra.mxu0 %v663
        %712 = vmatprep.mubr.bf16.mxu0 %v551
        %713 = vmatmul.mubr.bf16.gmra.mrb[0].mxu0 %v550
        %v714 = vpop.f32.mrb[0].mxu0
        %v715 = vadd.f32 0.0, %v714
        %v716 = vpop.f32.mrb[0].mxu0
        %v717 = vpop.f32.mrb[0].mxu0
        %v718 = vpop.f32.mrb[0].mxu0
        %719 = vdwg.mxu0
        %v720 = vadd.f32 %v549, %v715
        %721 = vst [vmem:[#allocation8] sm:$0xff] %v720
        // Predicated region
        $region49: #{tpu_custom_call.1} parent=31 // pred_check
          %p722 = pneg %p127
        $region50: #{tpu_custom_call.1} parent=31 // pred_check_branch
          %724 = sbr.rel (%p722) target = $region52
        $region51: #{tpu_custom_call.1} parent=31 // pred_region
          %s726 = ssub.s32 128, 128
          %727 = vsyncadd [#allocation4], %s726
          %s728 = smul.addr %s23, 128
          %s729 = scalar_lea.hbm %s3, %s728
          %s731 = sshll.u32 [#allocation8], 4
          %s732 = int_to_ptr.vmem [resolvable:$true] %s731
          %734 = dma.vmem_to_hbm [thread:$0]  %s732, 128, %s729, [#allocation4]
        $region52: #{tpu_custom_call.1} parent=31 // pred_fallthru
          _
        // Predicated region
        $region53: #{tpu_custom_call.1} parent=31 // pred_check
          %p735 = pneg %p127
        $region54: #{tpu_custom_call.1} parent=31 // pred_check_branch
          %737 = sbr.rel (%p735) target = $region56
        $region55: #{tpu_custom_call.1} parent=31 // pred_region
          %738 = dma.done [#allocation4], 128
        $region56: #{tpu_custom_call.1} parent=31 // pred_fallthru
          _
      $region32: #{tpu_custom_call.1} parent=5 // pred_fallthru
        _
      %p739 = scmp.le.s32.totalorder 2, %s14
      // Predicated region
      $region57: #{tpu_custom_call.1} parent=5 // pred_check
        %p740 = pneg %p739
      $region58: #{tpu_custom_call.1} parent=5 // pred_check_branch
        %742 = sbr.rel (%p740) target = $region60
      $region59: #{tpu_custom_call.1} parent=5 // pred_region
        %s743 = ssub.s32 %s14, 2
      $region60: #{tpu_custom_call.1} parent=5 // pred_fallthru
        _
    $region6: #{tpu_custom_call.1} parent=1 // loop_footer
      %s18 = sadd.s32 1, %s14
    $region7: #{tpu_custom_call.1} parent=1 // loop_footer_branch
      %13 = sbr.rel target = $region3
    $region8: #{tpu_custom_call.1} parent=1 // loop_exit
      _
    %744 = vsyncpa [#allocation3], 1
    %s745 = scalar_lea.sflag [#allocation3], 1
    %746 = vsyncpa %s745, 1
    %747 = vsyncpa [#allocation6], 1
    %s748 = scalar_lea.sflag [#allocation6], 1
    %749 = vsyncpa %s748, 1
    %750 = vsyncpa [#allocation4], 1
    %s751 = scalar_lea.sflag [#allocation4], 1
    %752 = vsyncpa %s751, 1

</llo_original>
